<compile_context>
chip_gen: v5e
topology: v5e:2x2
jax: 0.10.0
libtpu: 0.0.40
codegen_flags: <defaults>
</compile_context>

<pallas_src>
import jax
import jax.numpy as jnp
from jax.experimental import pallas as pl
from jax.experimental.pallas import tpu as pltpu


# ----------------------------- Pallas kernel ------------------------------- #

def _conv_seg_kernel(x_ref, w_ref, b_ref, o_ref):
    # x_ref: (C, T)   w_ref: (K, C)   b_ref: (K, 1)   o_ref: (K, T)
    acc = jnp.dot(w_ref[...], x_ref[...], preferred_element_type=jnp.float32)
    o_ref[...] = (acc + b_ref[...]).astype(o_ref.dtype)


def _pick_tile_hw(hw, c, k, vmem_budget_bytes=20 * 1024 * 1024):
    """Largest lane-dense pixel tile whose pipelined buffers fit the VMEM budget."""
    bytes_per_col = (2 * c + 2 * k) * 4        # double-buffered x tile + double-buffered out tile (f32)
    resident = (k * c + k) * 4                 # weight + bias stay resident across the grid
    max_cols = max(128, (vmem_budget_bytes - resident) // max(bytes_per_col, 1))
    tile = min(2048, int(max_cols))
    tile = max(128, (tile // 128) * 128)       # multiple of 128 lanes
    hw_pad128 = ((hw + 127) // 128) * 128
    return min(tile, hw_pad128)


def conv_seg_pallas(x_nchw, weight_kc, bias_k, *, vmem_budget_bytes=20 * 1024 * 1024):
    """1x1 conv (pixel classifier) in native NCHW layout.

    x_nchw:    (N, C, H, W) float32
    weight_kc: (K, C)       float32   (K = num_classes) -- PyTorch Conv2d weight squeezed
    bias_k:    (K,)         float32
    returns    (N, K, H, W) float32
    """
    N, C, H, W = x_nchw.shape
    K = weight_kc.shape[0]
    HW = H * W

    tile = _pick_tile_hw(HW, C, K, vmem_budget_bytes)
    hw_pad = ((HW + tile - 1) // tile) * tile

    x3 = x_nchw.reshape(N, C, HW)              # contiguous reshape, no transpose
    if hw_pad != HW:
        x3 = jnp.pad(x3, ((0, 0), (0, 0), (0, hw_pad - HW)))

    bias_2d = bias_k.reshape(K, 1)
    n_tiles = hw_pad // tile

    flops = 2 * N * HW * C * K
    bytes_accessed = 4 * (N * HW * C + N * HW * K + K * C + K)

    out = pl.pallas_call(
        _conv_seg_kernel,
        out_shape=jax.ShapeDtypeStruct((N, K, hw_pad), jnp.float32),
        grid_spec=pltpu.PrefetchScalarGridSpec(
            num_scalar_prefetch=0,
            grid=(N, n_tiles),
            in_specs=[
                # batch dim squeezed out; kernel sees (C, tile)
                pl.BlockSpec((None, C, tile), lambda n, j: (n, 0, j)),
                # weight and bias resident across all grid steps
                pl.BlockSpec((K, C), lambda n, j: (0, 0)),
                pl.BlockSpec((K, 1), lambda n, j: (0, 0)),
            ],
            out_specs=pl.BlockSpec((None, K, tile), lambda n, j: (n, 0, j)),
        ),
        compiler_params=pltpu.CompilerParams(
            dimension_semantics=("parallel", "parallel"),
            vmem_limit_bytes=32 * 1024 * 1024,
        ),
        cost_estimate=pl.CostEstimate(
            flops=flops, transcendentals=0, bytes_accessed=bytes_accessed),
    )(x3, weight_kc, bias_2d)

    if hw_pad != HW:
        out = out[:, :, :HW]
    return out.reshape(N, K, H, W)


# --------------------------- Module equivalent ------------------------------ #

class BaseDecodeHeadClipsPallas:
    """JAX/Pallas equivalent of BaseDecodeHead_clips (inference compute path)."""

    def __init__(self, in_channels, channels, *, num_classes, dropout_ratio=0.1,
                 in_index=-1, input_transform=None, align_corners=False,
                 num_clips=5, seed=0):
        # _init_inputs semantics (input_transform=None branch)
        assert input_transform is None, "only the default single-select path is implemented"
        assert isinstance(in_channels, int) and isinstance(in_index, int)
        self.in_channels = in_channels
        self.channels = channels
        self.num_classes = num_classes
        self.dropout_ratio = dropout_ratio
        self.in_index = in_index
        self.input_transform = input_transform
        self.align_corners = align_corners
        self.num_clips = num_clips

        # conv_seg = nn.Conv2d(channels, num_classes, kernel_size=1)
        # init_weights(): normal(mean=0, std=0.01), bias=0 — deterministic via PRNGKey.
        key = jax.random.PRNGKey(seed)
        # PyTorch weight layout: (num_classes, channels, 1, 1) -> stored here as (K, C)
        self.conv_seg_w = 0.01 * jax.random.normal(
            key, (num_classes, channels), dtype=jnp.float32)
        self.conv_seg_b = jnp.zeros((num_classes,), dtype=jnp.float32)

    def _transform_inputs(self, inputs):
        # input_transform is None -> select a single feature map
        return inputs[self.in_index]

    def cls_seg(self, feat_nchw):
        """Classify each pixel. feat_nchw: (N, channels, H, W) -> (N, num_classes, H, W)."""
        # TODO(synk): Dropout2d is stochastic at train time only; eval-mode identity implemented.
        N, C, H, W = feat_nchw.shape
        assert C == self.channels
        return conv_seg_pallas(feat_nchw, self.conv_seg_w, self.conv_seg_b)

    def forward(self, inputs, batch_size=None, num_clips=None):
        # The abstract forward of the base class; the concrete base-class computation
        # available is select -> cls_seg, which is what we expose here.
        feat = self._transform_inputs(inputs)
        return self.cls_seg(feat)


# ----------------------------- reference check ------------------------------ #

def _reference_conv_seg(feat_nchw, w_kc, b_k):
    """Pure-JAX reference: 1x1 conv in NCHW."""
    out = jnp.einsum("nchw,kc->nkhw", feat_nchw, w_kc) + b_k[None, :, None, None]
    return out


if __name__ == "__main__":
    key = jax.random.PRNGKey(0)

    # Small shapes consistent with the module: a list of multi-level features
    # (decode heads receive list[Tensor]); in_index=-1 selects the last one,
    # whose channel count equals `channels` for this synthetic head.
    batch = 2
    channels = 32
    num_classes = 8
    H = W = 16

    k0, k1 = jax.random.split(key)
    feat_lowres = jax.random.normal(k0, (batch, channels, H // 2, W // 2), dtype=jnp.float32)
    feat_main = jax.random.normal(k1, (batch, channels, H, W), dtype=jnp.float32)
    inputs = [feat_lowres, feat_main]  # list of multi-level img features (NCHW)

    head = BaseDecodeHeadClipsPallas(
        in_channels=channels,
        channels=channels,
        num_classes=num_classes,
        dropout_ratio=0.1,
        in_index=-1,
        input_transform=None,
        num_clips=5,
        seed=0,
    )

    out = head.forward(inputs, batch_size=batch, num_clips=5)
    out = jax.block_until_ready(out)

    # Correctness check against pure-JAX reference of Conv2d(kernel_size=1).
    ref = _reference_conv_seg(inputs[-1], head.conv_seg_w, head.conv_seg_b)
    assert out.shape == (batch, num_classes, H, W), out.shape
    assert jnp.allclose(out, ref, atol=1e-5, rtol=1e-5), float(jnp.max(jnp.abs(out - ref)))

    print("KERNEL_OK")
</pallas_src>

<mosaic_0001>
module attributes {stable_mosaic.version = 11 : i64} {
  func.func @_conv_seg_kernel(%arg0: i32, %arg1: i32, %arg2: memref<1x32x256xf32, #tpu.memory_space<vmem>>, %arg3: memref<8x32xf32, #tpu.memory_space<vmem>>, %arg4: memref<8x1xf32, #tpu.memory_space<vmem>>, %arg5: memref<1x8x256xf32, #tpu.memory_space<vmem>>) attributes {dimension_semantics = [#tpu.dimension_semantics<parallel>, #tpu.dimension_semantics<parallel>], iteration_bounds = array<i64: 2, 1>, scalar_prefetch = 0 : i64, scratch_operands = 0 : i64, tpu.core_type = #tpu.core_type<tc>, window_params = [{transform_indices = @transform_0, window_bounds = array<i64: 1, 32, 256>}, {pipeline_mode = #tpu.pipeline_mode<synchronous>, transform_indices = @transform_1, window_bounds = array<i64: 8, 32>}, {pipeline_mode = #tpu.pipeline_mode<synchronous>, transform_indices = @transform_2, window_bounds = array<i64: 8, 1>}, {transform_indices = @transform_3, window_bounds = array<i64: 1, 8, 256>}]} {
    %c0 = arith.constant 0 : index
    %c0_0 = arith.constant 0 : index
    %0 = vector.load %arg3[%c0, %c0_0] : memref<8x32xf32, #tpu.memory_space<vmem>>, vector<8x32xf32>
    %c0_1 = arith.constant 0 : index
    %c0_2 = arith.constant 0 : index
    %c0_3 = arith.constant 0 : index
    %1 = vector.load %arg2[%c0_1, %c0_2, %c0_3] : memref<1x32x256xf32, #tpu.memory_space<vmem>>, vector<1x32x256xf32>
    %2 = vector.shape_cast %1 : vector<1x32x256xf32> to vector<32x256xf32>
    %cst = arith.constant dense<0.000000e+00> : vector<8x256xf32>
    %3 = tpu.matmul %0, %2, %cst {dimension_numbers = #tpu.dot_dimension_numbers<[1], [0], [0], [1], [0, 0, 1, 1], [], []>} : vector<8x32xf32>, vector<32x256xf32>, vector<8x256xf32> -> vector<8x256xf32>
    %c0_4 = arith.constant 0 : index
    %c0_5 = arith.constant 0 : index
    %4 = vector.load %arg4[%c0_4, %c0_5] : memref<8x1xf32, #tpu.memory_space<vmem>>, vector<8x1xf32>
    %5 = vector.broadcast %4 : vector<8x1xf32> to vector<8x256xf32>
    %6 = arith.addf %3, %5 : vector<8x256xf32>
    %c0_6 = arith.constant 0 : index
    %c0_7 = arith.constant 0 : index
    %c0_8 = arith.constant 0 : index
    %7 = vector.load %arg5[%c0_6, %c0_7, %c0_8] : memref<1x8x256xf32, #tpu.memory_space<vmem>>, vector<1x8x256xf32>
    %8 = vector.shape_cast %7 : vector<1x8x256xf32> to vector<8x256xf32>
    %9 = vector.shape_cast %6 : vector<8x256xf32> to vector<1x8x256xf32>
    tpu.vector_store %arg5[%c0_6, %c0_7, %c0_8], %9 {strides = array<i32>} : memref<1x8x256xf32, #tpu.memory_space<vmem>>, vector<1x8x256xf32>,
    return
  }
  func.func @transform_0(%arg0: i32, %arg1: i32) -> (i32, i32, i32) {
    %c0_i32 = arith.constant 0 : i32
    %c0_i32_0 = arith.constant 0 : i32
    return %arg0, %c0_i32, %arg1 : i32, i32, i32
  }
  func.func @transform_1(%arg0: i32, %arg1: i32) -> (i32, i32) {
    %c0_i32 = arith.constant 0 : i32
    %c0_i32_0 = arith.constant 0 : i32
    %c0_i32_1 = arith.constant 0 : i32
    return %c0_i32, %c0_i32_0 : i32, i32
  }
  func.func @transform_2(%arg0: i32, %arg1: i32) -> (i32, i32) {
    %c0_i32 = arith.constant 0 : i32
    %c0_i32_0 = arith.constant 0 : i32
    %c0_i32_1 = arith.constant 0 : i32
    return %c0_i32, %c0_i32_0 : i32, i32
  }
  func.func @transform_3(%arg0: i32, %arg1: i32) -> (i32, i32, i32) {
    %c0_i32 = arith.constant 0 : i32
    %c0_i32_0 = arith.constant 0 : i32
    return %arg0, %c0_i32, %arg1 : i32, i32, i32
  }
}

</mosaic_0001>

<llo_original>
// kernel: tpu_custom_call.1
$region0: #{tpu_custom_call.1}
  #allocation0 [shape = 'u32[]', space=smem, size = 0x4, offset = 0x4, fixed_abs, tag = 'smem constant byte address 0x4 - core index']
  #allocation1 [shape = 'u32[72,128]{1,0:T(1,128)}', space=vmem, size = 0x9000, scoped, tag = 'internal scratch']
  %s0 = inlined_call_operand.hbm [shape: f32[2,32,256], index: 0, kind: input, shape index: {}]
  %s1 = inlined_call_operand.vmem [shape: f32[8,32], index: 1, kind: input, shape index: {}]
  %s2 = inlined_call_operand.vmem [shape: f32[8,1], index: 2, kind: input, shape index: {}]
  %s3 = inlined_call_operand.hbm [shape: f32[2,8,256], index: 3, kind: output, shape index: {}]
  %s4 = sld [smem:[#allocation0]]
  $region49: #{tpu_custom_call.1} parent=0
    _
  %s6 = ssub.s32 1, %s4
  %s7 = scalar_select 0, %s6, %s4
  $region1: #{tpu_custom_call.1} parent=0
    #allocation2 [shape = 'u8[65536]{0}', space=vmem, size = 0x10000, scoped, tag = 'input window, operand 0']
    #allocation3 [shape = 's32[2]{0}', space=sflag, size = 0x8, scoped, tag = 'scoped memory for tpu_custom_call.1']
    #allocation4 [shape = 's32[2]{0}', space=sflag, size = 0x8, scoped, tag = 'scoped memory for tpu_custom_call.1']
    #allocation5 [shape = 'u8[16384]{0}', space=vmem, size = 0x4000, scoped, tag = 'output window, operand 0']
    %8 = vsyncpa [#allocation3], 0
    %s9 = scalar_lea.sflag [#allocation3], 1
    %10 = vsyncpa %s9, 0
    %11 = vsyncpa [#allocation4], 0
    %s12 = scalar_lea.sflag [#allocation4], 1
    %13 = vsyncpa %s12, 0
    loop: start=0, step=1, limit=4
    $region2: #{tpu_custom_call.1} parent=1 // loop_pre_header
      _
    $region3: #{tpu_custom_call.1} parent=1 // loop_header
      %s15 = sphi 0, %s19
      %p16 = scmp.ge.s32.totalorder %s15, 4
      %s22 = sphi 0, %s34
      %s23 = sphi 0, %s30
      %s24 = sphi 0, %s22
      %s25 = sphi 0, %s23
      %s26 = sphi 0, %s24
      %s27 = sphi 0, %s25
      %s39 = sphi 0, %s41
      %s42 = sphi 0, %s39
      %s43 = sphi 0, %s42
      %s59 = sphi 0, %s43
      %s63 = sphi 0, %s63
      %s65 = sphi 0, %s63
      %s66 = sphi 0, %s65
      %s80 = sphi 0, %s66
      %s84 = sphi 0, %s84
      %s86 = sphi 0, %s84
      %s87 = sphi 0, %s86
      %s101 = sphi 0, %s87
      %s109 = sphi 0, %s111
      %s112 = sphi 0, %s109
      %s113 = sphi 0, %s112
      %s129 = sphi 0, %s113
    $region4: #{tpu_custom_call.1} parent=1 // loop_header_branch
      %18 = sbr.rel (%p16) target = $region8
    $region5: #{tpu_custom_call.1} parent=1 // loop_body
      %s20 = ssub.s32 %s15, 1
      %s21 = ssub.s32 %s15, 2
      %s28 = sadd.s32 1, %s23
      %p29 = scmp.ge.s32.totalorder %s28, 1
      %s30 = scalar_select %p29, 0, %s28
      %s31 = sadd.s32 1, %s22
      %s32 = scalar_select %p29, %s31, %s22
      %p33 = scmp.ge.s32.totalorder %s32, 2
      %s34 = scalar_select %p33, 0, %s32
      %s35 = ssub.s32 %s22, %s34
      %s36 = ssub.s32 %s23, %s30
      %s37 = sor.u32 %s35, %s36
      %p38 = scmp.eq.s32.totalorder %s37, 0
      %s40 = sadd.s32 %s39, 1
      %s41 = scalar_select %p38, %s39, %s40
      %p44 = pneg %p38
      %p45 = scmp.eq.s32.totalorder %s15, 1
      %p46 = por %p44, %p45
      %p47 = scmp.ne.s32.totalorder %s39, %s42
      %p48 = scmp.eq.s32.totalorder %s15, 0
      %p49 = por %p47, %p48
      %p50 = scmp.ne.s32.totalorder %s39, %s42
      %p51 = scmp.eq.s32.totalorder %s20, 1
      %p52 = por %p50, %p51
      %p53 = scmp.ne.s32.totalorder %s42, %s43
      %p54 = scmp.eq.s32.totalorder %s20, 0
      %p55 = por %p53, %p54
      %p56 = scmp.ne.s32.totalorder %s42, %s43
      %p57 = scmp.eq.s32.totalorder %s21, 1
      %p58 = por %p56, %p57
      %p60 = scmp.ne.s32.totalorder %s43, %s59
      %p61 = scmp.eq.s32.totalorder %s21, 0
      %p62 = por %p60, %p61
      %s64 = sadd.s32 %s63, 1
      %p67 = scmp.eq.s32.totalorder %s15, 1
      %p68 = scmp.ne.s32.totalorder %s63, %s65
      %p69 = scmp.eq.s32.totalorder %s15, 0
      %p70 = por %p68, %p69
      %p71 = scmp.ne.s32.totalorder %s63, %s65
      %p72 = scmp.eq.s32.totalorder %s20, 1
      %p73 = por %p71, %p72
      %p74 = scmp.ne.s32.totalorder %s65, %s66
      %p75 = scmp.eq.s32.totalorder %s20, 0
      %p76 = por %p74, %p75
      %p77 = scmp.ne.s32.totalorder %s65, %s66
      %p78 = scmp.eq.s32.totalorder %s21, 1
      %p79 = por %p77, %p78
      %p81 = scmp.ne.s32.totalorder %s66, %s80
      %p82 = scmp.eq.s32.totalorder %s21, 0
      %p83 = por %p81, %p82
      %s85 = sadd.s32 %s84, 1
      %p88 = scmp.eq.s32.totalorder %s15, 1
      %p89 = scmp.ne.s32.totalorder %s84, %s86
      %p90 = scmp.eq.s32.totalorder %s15, 0
      %p91 = por %p89, %p90
      %p92 = scmp.ne.s32.totalorder %s84, %s86
      %p93 = scmp.eq.s32.totalorder %s20, 1
      %p94 = por %p92, %p93
      %p95 = scmp.ne.s32.totalorder %s86, %s87
      %p96 = scmp.eq.s32.totalorder %s20, 0
      %p97 = por %p95, %p96
      %p98 = scmp.ne.s32.totalorder %s86, %s87
      %p99 = scmp.eq.s32.totalorder %s21, 1
      %p100 = por %p98, %p99
      %p102 = scmp.ne.s32.totalorder %s87, %s101
      %p103 = scmp.eq.s32.totalorder %s21, 0
      %p104 = por %p102, %p103
      %s105 = ssub.s32 %s22, %s34
      %s106 = ssub.s32 %s23, %s30
      %s107 = sor.u32 %s105, %s106
      %p108 = scmp.eq.s32.totalorder %s107, 0
      %s110 = sadd.s32 %s109, 1
      %s111 = scalar_select %p108, %s109, %s110
      %p114 = pneg %p108
      %p115 = scmp.eq.s32.totalorder %s15, 1
      %p116 = por %p114, %p115
      %p117 = scmp.ne.s32.totalorder %s109, %s112
      %p118 = scmp.eq.s32.totalorder %s15, 0
      %p119 = por %p117, %p118
      %p120 = scmp.ne.s32.totalorder %s109, %s112
      %p121 = scmp.eq.s32.totalorder %s20, 1
      %p122 = por %p120, %p121
      %p123 = scmp.ne.s32.totalorder %s112, %s113
      %p124 = scmp.eq.s32.totalorder %s20, 0
      %p125 = por %p123, %p124
      %p126 = scmp.ne.s32.totalorder %s112, %s113
      %p127 = scmp.eq.s32.totalorder %s21, 1
      %p128 = por %p126, %p127
      %p130 = scmp.ne.s32.totalorder %s113, %s129
      %p131 = scmp.eq.s32.totalorder %s21, 0
      %p132 = por %p130, %p131
      %p133 = scmp.le.s32.totalorder 1, %s15
      %p134 = scmp.lt.s32.totalorder %s15, 3
      %p135 = pnand %p133, %p134
      %p136 = pneg %p135
      // Predicated region
      $region9: #{tpu_custom_call.1} parent=5 // pred_check
        _
      $region10: #{tpu_custom_call.1} parent=5 // pred_check_branch
        %138 = sbr.rel (%p135) target = $region12
      $region11: #{tpu_custom_call.1} parent=5 // pred_region
        %s139 = ssub.s32 %s15, 1
        // Predicated region
        $region13: #{tpu_custom_call.1} parent=11 // pred_check
          %p140 = pneg %p76
        $region14: #{tpu_custom_call.1} parent=11 // pred_check_branch
          %142 = sbr.rel (%p140) target = $region16
        $region15: #{tpu_custom_call.1} parent=11 // pred_region
          _
        $region16: #{tpu_custom_call.1} parent=11 // pred_fallthru
          _
        // Predicated region
        $region17: #{tpu_custom_call.1} parent=11 // pred_check
          %p143 = pneg %p97
        $region18: #{tpu_custom_call.1} parent=11 // pred_check_branch
          %145 = sbr.rel (%p143) target = $region20
        $region19: #{tpu_custom_call.1} parent=11 // pred_region
          _
        $region20: #{tpu_custom_call.1} parent=11 // pred_fallthru
          _
      $region12: #{tpu_custom_call.1} parent=5 // pred_fallthru
        _
      %p146 = scmp.lt.s32.totalorder %s15, 2
      // Predicated region
      $region21: #{tpu_custom_call.1} parent=5 // pred_check
        %p147 = pneg %p146
      $region22: #{tpu_custom_call.1} parent=5 // pred_check_branch
        %149 = sbr.rel (%p147) target = $region24
      $region23: #{tpu_custom_call.1} parent=5 // pred_region
        // Predicated region
        $region25: #{tpu_custom_call.1} parent=23 // pred_check
          %p150 = pneg %p49
        $region26: #{tpu_custom_call.1} parent=23 // pred_check_branch
          %152 = sbr.rel (%p150) target = $region28
        $region27: #{tpu_custom_call.1} parent=23 // pred_region
          %s153 = sand.u32 %s39, 1
          %s154 = scalar_lea.sflag [#allocation3], %s153
          %s155 = sand.u32 %s39, 1
          %s156 = smul.addr %s155, 64
          %s157 = scalar_lea.vmem [#allocation2], %s156
          %s158 = smul.u32 2, %s23
          %160 = vsyncadd %s154, 0
          %s161 = smul.addr %s22, 8
          %s162 = sadd.s32 %s158, %s161
          %s163 = smul.addr %s162, 8
          %s164 = scalar_lea.hbm %s0, %s163
          %s165 = sshll.u32 %s164, 4
          %s166 = int_to_ptr.hbm [resolvable:$true] %s165
          %s167 = sshll.u32 %s157, 4
          %s168 = int_to_ptr.vmem [resolvable:$true] %s167
          %173 = dma.hbm_to_vmem [thread:$0]  %s166, 1024, %s168, %s154, 256, 256, 16
        $region28: #{tpu_custom_call.1} parent=23 // pred_fallthru
          _
      $region24: #{tpu_custom_call.1} parent=5 // pred_fallthru
        _
      %p174 = scmp.le.s32.totalorder 1, %s15
      %p175 = scmp.lt.s32.totalorder %s15, 3
      %p176 = pnand %p174, %p175
      %p177 = pneg %p176
      // Predicated region
      $region29: #{tpu_custom_call.1} parent=5 // pred_check
        _
      $region30: #{tpu_custom_call.1} parent=5 // pred_check_branch
        %179 = sbr.rel (%p176) target = $region32
      $region31: #{tpu_custom_call.1} parent=5 // pred_region
        %s180 = ssub.s32 %s15, 1
        %s181 = sand.u32 %s42, 1
        %s182 = scalar_lea.sflag [#allocation3], %s181
        %s183 = sand.u32 %s42, 1
        %s184 = smul.addr %s183, 64
        %s185 = scalar_lea.vmem [#allocation2], %s184
        // Predicated region
        $region33: #{tpu_custom_call.1} parent=31 // pred_check
          %p186 = pneg %p55
        $region34: #{tpu_custom_call.1} parent=31 // pred_check_branch
          %188 = sbr.rel (%p186) target = $region36
        $region35: #{tpu_custom_call.1} parent=31 // pred_region
          %190 = dma.done %s182, 1024
        $region36: #{tpu_custom_call.1} parent=31 // pred_fallthru
          _
        %s191 = sand.u32 %s42, 1
        %s192 = scalar_lea.sflag [#allocation3], %s191
        %s193 = sand.u32 %s42, 1
        %s194 = smul.addr %s193, 64
        %s195 = scalar_lea.vmem [#allocation2], %s194
        %p196 = pneg %p55
        %p197 = pneg %p52
        %p198 = pneg %p76
        %p199 = pneg %p73
        %p200 = pneg %p97
        %p201 = pneg %p94
        %p202 = pneg %p125
        %p203 = pneg %p122
        %s204 = sand.u32 %s112, 1
        %s205 = scalar_lea.sflag [#allocation4], %s204
        %s206 = sand.u32 %s112, 1
        %s207 = smul.addr %s206, 16
        %s208 = scalar_lea.vmem [#allocation5], %s207
        %s209 = smul.u32 2, %s25
        %s210 = smul.u32 2, %s25
        %v211 = vld [vmem:[%s1] sm:$0xff]
        %v212 = vld [vmem:[%s185] sm:$0xff]
        %v213 = vld [vmem:[%s185 + $0x8] sm:$0xff]
        %v214 = vld [vmem:[%s185 + $0x10] sm:$0xff]
        %v215 = vld [vmem:[%s185 + $0x18] sm:$0xff]
        %v216 = vld [vmem:[%s185 + $0x20] sm:$0xff]
        %v217 = vld [vmem:[%s185 + $0x28] sm:$0xff]
        %v218 = vld [vmem:[%s185 + $0x30] sm:$0xff]
        %v219 = vld [vmem:[%s185 + $0x38] sm:$0xff]
        %v220 = vld [vmem:[%s2] sm:$0xff]
        %222 = vset.pattern.permute.xlu0 0
        %223 = vperm.xlu0 %222, %v220
        %v224 = vpop.permute.xlu0 %223
        %vm226 = vcmask 261120
        %v228 = vsel %vm226, %v211, 0
        %230 = vmatpush.msra.mxu0 0.0
        %231 = vmatpush.msra.mxu0 0.0
        %232 = vmatpush.msra.mxu0 0.0
        %233 = vmatpush.msra.mxu0 0.0
        %234 = vmatpush.msra.mxu0 0.0
        %235 = vmatpush.msra.mxu0 0.0
        %236 = vmatpush.msra.mxu0 0.0
        %237 = vmatpush.msra.mxu0 0.0
        %238 = vmatpush.msra.mxu0 0.0
        %239 = vmatpush.msra.mxu0 0.0
        %240 = vmatpush.msra.mxu0 0.0
        %241 = vmatpush.msra.mxu0 0.0
        %242 = vmatpush.msra.mxu0 %v218
        %243 = vmatpush.msra.mxu0 %v216
        %244 = vmatpush.msra.mxu0 %v214
        %245 = vmatpush.msra.mxu0 %v212
        %246 = vmatmul.f32.gmra.mxu0 %v228
        %v247 = vpop.f32.mrf.mxu0
        %v248 = vadd.f32 %v224, %v247
        %249 = vdwg.mxu0
        %250 = vmatpush.msra.mxu0 0.0
        %251 = vmatpush.msra.mxu0 0.0
        %252 = vmatpush.msra.mxu0 0.0
        %253 = vmatpush.msra.mxu0 0.0
        %254 = vmatpush.msra.mxu0 0.0
        %255 = vmatpush.msra.mxu0 0.0
        %256 = vmatpush.msra.mxu0 0.0
        %257 = vmatpush.msra.mxu0 0.0
        %258 = vmatpush.msra.mxu0 0.0
        %259 = vmatpush.msra.mxu0 0.0
        %260 = vmatpush.msra.mxu0 0.0
        %261 = vmatpush.msra.mxu0 0.0
        %262 = vmatpush.msra.mxu0 %v219
        %263 = vmatpush.msra.mxu0 %v217
        %264 = vmatpush.msra.mxu0 %v215
        %265 = vmatpush.msra.mxu0 %v213
        %266 = vmatmul.f32.gmra.mxu0 %v228
        %v267 = vpop.f32.mrf.mxu0
        %v268 = vadd.f32 %v224, %v267
        %269 = vdwg.mxu0
        %270 = vst [vmem:[%s208] sm:$0xff] %v248
        %271 = vst [vmem:[%s208 + $0x8] sm:$0xff] %v268
        %s272 = sand.u32 %s112, 1
        %s273 = scalar_lea.sflag [#allocation4], %s272
        %s274 = sand.u32 %s112, 1
        %s275 = smul.addr %s274, 16
        %s276 = scalar_lea.vmem [#allocation5], %s275
        // Predicated region
        $region37: #{tpu_custom_call.1} parent=31 // pred_check
          %p277 = pneg %p122
        $region38: #{tpu_custom_call.1} parent=31 // pred_check_branch
          %279 = sbr.rel (%p277) target = $region40
        $region39: #{tpu_custom_call.1} parent=31 // pred_region
          %s280 = smul.u32 2, %s25
          %282 = vsyncadd %s273, 0
          %s283 = smul.addr %s24, 2
          %s284 = sadd.s32 %s280, %s283
          %s285 = smul.addr %s284, 8
          %s286 = scalar_lea.hbm %s3, %s285
          %s288 = sshll.u32 %s276, 4
          %s289 = int_to_ptr.vmem [resolvable:$true] %s288
          %s290 = sshll.u32 %s286, 4
          %s291 = int_to_ptr.hbm [resolvable:$true] %s290
          %293 = dma.vmem_to_hbm [thread:$0]  %s289, 256, %s291, %s273
        $region40: #{tpu_custom_call.1} parent=31 // pred_fallthru
          _
      $region32: #{tpu_custom_call.1} parent=5 // pred_fallthru
        _
      %p294 = scmp.le.s32.totalorder 2, %s15
      // Predicated region
      $region41: #{tpu_custom_call.1} parent=5 // pred_check
        %p295 = pneg %p294
      $region42: #{tpu_custom_call.1} parent=5 // pred_check_branch
        %297 = sbr.rel (%p295) target = $region44
      $region43: #{tpu_custom_call.1} parent=5 // pred_region
        %s298 = ssub.s32 %s15, 2
        // Predicated region
        $region45: #{tpu_custom_call.1} parent=43 // pred_check
          %p299 = pneg %p128
        $region46: #{tpu_custom_call.1} parent=43 // pred_check_branch
          %301 = sbr.rel (%p299) target = $region48
        $region47: #{tpu_custom_call.1} parent=43 // pred_region
          %s302 = sand.u32 %s113, 1
          %s303 = scalar_lea.sflag [#allocation4], %s302
          %s304 = sand.u32 %s113, 1
          %s305 = smul.addr %s304, 16
          %s306 = scalar_lea.vmem [#allocation5], %s305
          %308 = dma.done %s303, 256
        $region48: #{tpu_custom_call.1} parent=43 // pred_fallthru
          _
      $region44: #{tpu_custom_call.1} parent=5 // pred_fallthru
        _
    $region6: #{tpu_custom_call.1} parent=1 // loop_footer
      %s19 = sadd.s32 1, %s15
    $region7: #{tpu_custom_call.1} parent=1 // loop_footer_branch
      %14 = sbr.rel target = $region3
    $region8: #{tpu_custom_call.1} parent=1 // loop_exit
      _
    %309 = vsyncpa [#allocation3], 1
    %s310 = scalar_lea.sflag [#allocation3], 1
    %311 = vsyncpa %s310, 1
    %312 = vsyncpa [#allocation4], 1
    %s313 = scalar_lea.sflag [#allocation4], 1
    %314 = vsyncpa %s313, 1

</llo_original>
